<compile_context>
chip_gen: v7x
topology: tpu7x:2x2x1
jax: 0.10.0
libtpu: 0.0.40
codegen_flags: <defaults>
</compile_context>

<pallas_src>
import jax
import jax.numpy as jnp
from jax.experimental import pallas as pl
from jax.experimental.pallas import tpu as pltpu

C_IN = 3
C_OUT = 3
LANE = 128          # lane width of the flattened spatial axis
MAX_S_TILE = 1024   # sublane-rows per grid step (multiple of 8); ~3 MiB blocks


def _round_up(x, m):
    return ((x + m - 1) // m) * m


def convt1x1_kernel(w_ref, b_ref, x_ref, o_ref):
    # w_ref: (C_IN, C_OUT) f32 in SMEM (scalar prefetch)
    # b_ref: (C_OUT,)      f32 in SMEM (scalar prefetch)
    # x_ref: (1, C_IN,  s_tile, 128) VMEM block
    # o_ref: (1, C_OUT, s_tile, 128) VMEM block
    xs = [x_ref[0, ci] for ci in range(C_IN)]        # (s_tile, 128) dense slabs
    for co in range(C_OUT):
        acc = xs[0] * w_ref[0, co]
        for ci in range(1, C_IN):
            acc = acc + xs[ci] * w_ref[ci, co]
        o_ref[0, co] = acc + b_ref[co]               # unmasked lane-dense store
    # The PyTorch module also computes v = sigmoid(t) but returns t; the
    # sigmoid is dead code, so it is intentionally not emitted here.


def conv_transpose_1x1(x_nchw, weight, bias):
    """x_nchw: (N, C_in, H, W) f32; weight: (C_in, C_out); bias: (C_out,)."""
    N, C, H, W = x_nchw.shape
    assert C == C_IN
    hw = H * W

    # Flatten spatial -> lane-dense (S, 128) slabs per (n, c).  The reshape is
    # free when H*W is a multiple of 128 (the demo case); otherwise pad once.
    # TODO(synk): handle hw % 128 != 0 fully in-kernel (masked lane tail) to
    # drop this pad/slice as well.
    hw_pad = _round_up(hw, LANE)
    x3 = x_nchw.reshape(N, C, hw)
    if hw_pad != hw:
        x3 = jnp.pad(x3, ((0, 0), (0, 0), (0, hw_pad - hw)))
    S = hw_pad // LANE
    x4 = x3.reshape(N, C, S, LANE)

    # Tile the S axis.  Ragged final S-blocks are masked by Pallas, so S does
    # NOT need to be padded to a multiple of s_tile.
    if S <= MAX_S_TILE:
        s_tile = S                       # full-extent block is always legal
    else:
        s_tile = MAX_S_TILE              # multiple of 8; last block may be partial
    num_s_blocks = pl.cdiv(S, s_tile)
    # Guarantee >= 2 grid steps so v7x megacore can shard the work.
    if N * num_s_blocks < 2 and S >= 16:
        s_tile = _round_up(pl.cdiv(S, 2), 8)
        num_s_blocks = pl.cdiv(S, s_tile)

    # Explicit VMEM budget: double-buffered input + output blocks + headroom.
    in_block_bytes = C_IN * s_tile * LANE * 4
    out_block_bytes = C_OUT * s_tile * LANE * 4
    vmem_limit = max(2 * (in_block_bytes + out_block_bytes) + (2 << 20), 4 << 20)

    out4 = pl.pallas_call(
        convt1x1_kernel,
        out_shape=jax.ShapeDtypeStruct((N, C_OUT, S, LANE), x_nchw.dtype),
        grid_spec=pltpu.PrefetchScalarGridSpec(
            num_scalar_prefetch=2,                   # weight, bias -> SMEM once
            grid=(N, num_s_blocks),
            in_specs=[
                pl.BlockSpec((1, C_IN, s_tile, LANE),
                             lambda n, t, w, b: (n, 0, t, 0)),
            ],
            out_specs=pl.BlockSpec((1, C_OUT, s_tile, LANE),
                                   lambda n, t, w, b: (n, 0, t, 0)),
        ),
        compiler_params=pltpu.CompilerParams(
            dimension_semantics=("parallel", "parallel"),
            vmem_limit_bytes=int(vmem_limit),
        ),
    )(weight, bias, x4)

    # Free reshape back to NCHW (slice only if the lane axis was padded).
    out = out4.reshape(N, C_OUT, hw_pad)
    if hw_pad != hw:
        out = out[:, :, :hw]
    return out.reshape(N, C_OUT, H, W)


if __name__ == "__main__":
    key = jax.random.PRNGKey(0)
    kx, kw, kb = jax.random.split(key, 3)

    # Small shapes consistent with the module (3 input channels).
    N, H, W = 2, 16, 16
    x = jax.random.normal(kx, (N, C_IN, H, W), dtype=jnp.float32)

    # Deterministic parameter init (ConvTranspose2d weight (C_in, C_out, 1, 1)
    # collapsed to (C_in, C_out)).
    fan = C_IN  # kernel_size = 1
    bound = 1.0 / (fan ** 0.5)
    weight = jax.random.uniform(kw, (C_IN, C_OUT), jnp.float32, -bound, bound)
    bias = jax.random.uniform(kb, (C_OUT,), jnp.float32, -bound, bound)

    out = conv_transpose_1x1(x, weight, bias)
    out = jax.block_until_ready(out)

    # Pure-JAX reference for sanity.
    ref = jnp.einsum("nchw,cd->ndhw", x, weight) + bias[None, :, None, None]
    assert out.shape == (N, C_OUT, H, W)
    assert jnp.allclose(out, ref, atol=1e-5, rtol=1e-5)

    print("KERNEL_OK")
</pallas_src>

<mosaic_0001>
module attributes {stable_mosaic.version = 11 : i64} {
  func.func @convt1x1_kernel(%arg0: i32, %arg1: i32, %arg2: memref<3x3xf32, #tpu.memory_space<smem>>, %arg3: memref<3xf32, #tpu.memory_space<smem>>, %arg4: memref<1x3x2x128xf32, #tpu.memory_space<vmem>>, %arg5: memref<1x3x2x128xf32, #tpu.memory_space<vmem>>) attributes {dimension_semantics = [#tpu.dimension_semantics<parallel>, #tpu.dimension_semantics<parallel>], iteration_bounds = array<i64: 2, 1>, scalar_prefetch = 2 : i64, scratch_operands = 0 : i64, tpu.core_type = #tpu.core_type<tc>, window_params = [{transform_indices = @transform_0, window_bounds = array<i64: 1, 3, 2, 128>}, {transform_indices = @transform_1, window_bounds = array<i64: 1, 3, 2, 128>}]} {
    %c0 = arith.constant 0 : index
    %c0_0 = arith.constant 0 : index
    %c0_1 = arith.constant 0 : index
    %c0_2 = arith.constant 0 : index
    %0 = vector.load %arg4[%c0, %c0_0, %c0_1, %c0_2] : memref<1x3x2x128xf32, #tpu.memory_space<vmem>>, vector<1x1x2x128xf32>
    %1 = vector.shape_cast %0 : vector<1x1x2x128xf32> to vector<2x128xf32>
    %c0_3 = arith.constant 0 : index
    %c1 = arith.constant 1 : index
    %c0_4 = arith.constant 0 : index
    %c0_5 = arith.constant 0 : index
    %2 = vector.load %arg4[%c0_3, %c1, %c0_4, %c0_5] : memref<1x3x2x128xf32, #tpu.memory_space<vmem>>, vector<1x1x2x128xf32>
    %3 = vector.shape_cast %2 : vector<1x1x2x128xf32> to vector<2x128xf32>
    %c0_6 = arith.constant 0 : index
    %c2 = arith.constant 2 : index
    %c0_7 = arith.constant 0 : index
    %c0_8 = arith.constant 0 : index
    %4 = vector.load %arg4[%c0_6, %c2, %c0_7, %c0_8] : memref<1x3x2x128xf32, #tpu.memory_space<vmem>>, vector<1x1x2x128xf32>
    %5 = vector.shape_cast %4 : vector<1x1x2x128xf32> to vector<2x128xf32>
    %c0_9 = arith.constant 0 : index
    %c0_10 = arith.constant 0 : index
    %6 = memref.load %arg2[%c0_9, %c0_10] : memref<3x3xf32, #tpu.memory_space<smem>>
    %7 = vector.broadcast %6 : f32 to vector<2x128xf32>
    %8 = arith.mulf %1, %7 : vector<2x128xf32>
    %c1_11 = arith.constant 1 : index
    %c0_12 = arith.constant 0 : index
    %9 = memref.load %arg2[%c1_11, %c0_12] : memref<3x3xf32, #tpu.memory_space<smem>>
    %10 = vector.broadcast %9 : f32 to vector<2x128xf32>
    %11 = arith.mulf %3, %10 : vector<2x128xf32>
    %12 = arith.addf %8, %11 : vector<2x128xf32>
    %c2_13 = arith.constant 2 : index
    %c0_14 = arith.constant 0 : index
    %13 = memref.load %arg2[%c2_13, %c0_14] : memref<3x3xf32, #tpu.memory_space<smem>>
    %14 = vector.broadcast %13 : f32 to vector<2x128xf32>
    %15 = arith.mulf %5, %14 : vector<2x128xf32>
    %16 = arith.addf %12, %15 : vector<2x128xf32>
    %c0_15 = arith.constant 0 : index
    %17 = memref.load %arg3[%c0_15] : memref<3xf32, #tpu.memory_space<smem>>
    %18 = vector.broadcast %17 : f32 to vector<2x128xf32>
    %19 = arith.addf %16, %18 : vector<2x128xf32>
    %c0_16 = arith.constant 0 : index
    %c0_17 = arith.constant 0 : index
    %c0_18 = arith.constant 0 : index
    %c0_19 = arith.constant 0 : index
    %20 = vector.load %arg5[%c0_16, %c0_17, %c0_18, %c0_19] : memref<1x3x2x128xf32, #tpu.memory_space<vmem>>, vector<1x1x2x128xf32>
    %21 = vector.shape_cast %20 : vector<1x1x2x128xf32> to vector<2x128xf32>
    %22 = vector.shape_cast %19 : vector<2x128xf32> to vector<1x1x2x128xf32>
    tpu.vector_store %arg5[%c0_16, %c0_17, %c0_18, %c0_19], %22 {strides = array<i32>} : memref<1x3x2x128xf32, #tpu.memory_space<vmem>>, vector<1x1x2x128xf32>,
    %c0_20 = arith.constant 0 : index
    %c1_21 = arith.constant 1 : index
    %23 = memref.load %arg2[%c0_20, %c1_21] : memref<3x3xf32, #tpu.memory_space<smem>>
    %24 = vector.broadcast %23 : f32 to vector<2x128xf32>
    %25 = arith.mulf %1, %24 : vector<2x128xf32>
    %c1_22 = arith.constant 1 : index
    %c1_23 = arith.constant 1 : index
    %26 = memref.load %arg2[%c1_22, %c1_23] : memref<3x3xf32, #tpu.memory_space<smem>>
    %27 = vector.broadcast %26 : f32 to vector<2x128xf32>
    %28 = arith.mulf %3, %27 : vector<2x128xf32>
    %29 = arith.addf %25, %28 : vector<2x128xf32>
    %c2_24 = arith.constant 2 : index
    %c1_25 = arith.constant 1 : index
    %30 = memref.load %arg2[%c2_24, %c1_25] : memref<3x3xf32, #tpu.memory_space<smem>>
    %31 = vector.broadcast %30 : f32 to vector<2x128xf32>
    %32 = arith.mulf %5, %31 : vector<2x128xf32>
    %33 = arith.addf %29, %32 : vector<2x128xf32>
    %c1_26 = arith.constant 1 : index
    %34 = memref.load %arg3[%c1_26] : memref<3xf32, #tpu.memory_space<smem>>
    %35 = vector.broadcast %34 : f32 to vector<2x128xf32>
    %36 = arith.addf %33, %35 : vector<2x128xf32>
    %c0_27 = arith.constant 0 : index
    %c1_28 = arith.constant 1 : index
    %c0_29 = arith.constant 0 : index
    %c0_30 = arith.constant 0 : index
    %37 = vector.load %arg5[%c0_27, %c1_28, %c0_29, %c0_30] : memref<1x3x2x128xf32, #tpu.memory_space<vmem>>, vector<1x1x2x128xf32>
    %38 = vector.shape_cast %37 : vector<1x1x2x128xf32> to vector<2x128xf32>
    %39 = vector.shape_cast %36 : vector<2x128xf32> to vector<1x1x2x128xf32>
    tpu.vector_store %arg5[%c0_27, %c1_28, %c0_29, %c0_30], %39 {strides = array<i32>} : memref<1x3x2x128xf32, #tpu.memory_space<vmem>>, vector<1x1x2x128xf32>,
    %c0_31 = arith.constant 0 : index
    %c2_32 = arith.constant 2 : index
    %40 = memref.load %arg2[%c0_31, %c2_32] : memref<3x3xf32, #tpu.memory_space<smem>>
    %41 = vector.broadcast %40 : f32 to vector<2x128xf32>
    %42 = arith.mulf %1, %41 : vector<2x128xf32>
    %c1_33 = arith.constant 1 : index
    %c2_34 = arith.constant 2 : index
    %43 = memref.load %arg2[%c1_33, %c2_34] : memref<3x3xf32, #tpu.memory_space<smem>>
    %44 = vector.broadcast %43 : f32 to vector<2x128xf32>
    %45 = arith.mulf %3, %44 : vector<2x128xf32>
    %46 = arith.addf %42, %45 : vector<2x128xf32>
    %c2_35 = arith.constant 2 : index
    %c2_36 = arith.constant 2 : index
    %47 = memref.load %arg2[%c2_35, %c2_36] : memref<3x3xf32, #tpu.memory_space<smem>>
    %48 = vector.broadcast %47 : f32 to vector<2x128xf32>
    %49 = arith.mulf %5, %48 : vector<2x128xf32>
    %50 = arith.addf %46, %49 : vector<2x128xf32>
    %c2_37 = arith.constant 2 : index
    %51 = memref.load %arg3[%c2_37] : memref<3xf32, #tpu.memory_space<smem>>
    %52 = vector.broadcast %51 : f32 to vector<2x128xf32>
    %53 = arith.addf %50, %52 : vector<2x128xf32>
    %c0_38 = arith.constant 0 : index
    %c2_39 = arith.constant 2 : index
    %c0_40 = arith.constant 0 : index
    %c0_41 = arith.constant 0 : index
    %54 = vector.load %arg5[%c0_38, %c2_39, %c0_40, %c0_41] : memref<1x3x2x128xf32, #tpu.memory_space<vmem>>, vector<1x1x2x128xf32>
    %55 = vector.shape_cast %54 : vector<1x1x2x128xf32> to vector<2x128xf32>
    %56 = vector.shape_cast %53 : vector<2x128xf32> to vector<1x1x2x128xf32>
    tpu.vector_store %arg5[%c0_38, %c2_39, %c0_40, %c0_41], %56 {strides = array<i32>} : memref<1x3x2x128xf32, #tpu.memory_space<vmem>>, vector<1x1x2x128xf32>,
    return
  }
  func.func @transform_0(%arg0: i32, %arg1: i32, %arg2: memref<3x3xf32, #tpu.memory_space<smem>>, %arg3: memref<3xf32, #tpu.memory_space<smem>>) -> (i32, i32, i32, i32) {
    %c0_i32 = arith.constant 0 : i32
    %c0_i32_0 = arith.constant 0 : i32
    %c0_i32_1 = arith.constant 0 : i32
    return %arg0, %c0_i32, %arg1, %c0_i32_0 : i32, i32, i32, i32
  }
  func.func @transform_1(%arg0: i32, %arg1: i32, %arg2: memref<3x3xf32, #tpu.memory_space<smem>>, %arg3: memref<3xf32, #tpu.memory_space<smem>>) -> (i32, i32, i32, i32) {
    %c0_i32 = arith.constant 0 : i32
    %c0_i32_0 = arith.constant 0 : i32
    %c0_i32_1 = arith.constant 0 : i32
    return %arg0, %c0_i32, %arg1, %c0_i32_0 : i32, i32, i32, i32
  }
}

</mosaic_0001>

<llo_original>
// kernel: tpu_custom_call.1
$region0: #{tpu_custom_call.1}
  #allocation0 [shape = 'u32[]', space=smem, size = 0x4, offset = 0x4, fixed_abs, tag = 'smem constant byte address 0x4 - core index']
  #allocation1 [shape = 'u32[144,128]{1,0:T(1,128)}', space=vmem, size = 0x12000, scoped, tag = 'internal scratch']
  #allocation2 [shape = 's32[1]{0}', space=sflag, size = 0x4, scoped, tag = 'scoped memory for tpu_custom_call.1']
  #allocation3 [shape = 'u8[2048]{0}', space=smem, size = 0x800, scoped, tag = 'prefetched SMEM operand 0']
  #allocation4 [shape = 'u8[512]{0}', space=smem, size = 0x200, scoped, tag = 'prefetched SMEM operand 1']
  %s0 = inlined_call_operand.hbm [shape: f32[3,3], index: 0, kind: input, shape index: {}]
  %s1 = inlined_call_operand.vmem [shape: f32[3], index: 1, kind: input, shape index: {}]
  %s2 = inlined_call_operand.hbm [shape: f32[2,3,2,128], index: 2, kind: input, shape index: {}]
  %s3 = inlined_call_operand.hbm [shape: f32[2,3,2,128], index: 3, kind: output, shape index: {}]
  %s4 = sld [smem:[#allocation0]]
  $region41: #{tpu_custom_call.1} parent=0
    _
  %s6 = ssub.s32 1, %s4
  %s7 = scalar_select 0, %s6, %s4
  %9 = dma.hbm_to_smem %s0, 64, [#allocation3], [#allocation2]
  %s10 = sshll.u32 %s1, 4
  %s11 = int_to_ptr.vmem [resolvable:$true] %s10
  %13 = dma.vmem_to_smem %s11, 16, [#allocation4], [#allocation2]
  %14 = dma.done [#allocation2], 80
  %15 = sfence
  $region1: #{tpu_custom_call.1} parent=0
    #allocation5 [shape = 'u8[6144]{0}', space=vmem, size = 0x1800, scoped, tag = 'input window, operand 2']
    #allocation6 [shape = 's32[2]{0}', space=sflag, size = 0x8, scoped, tag = 'scoped memory for tpu_custom_call.1']
    #allocation7 [shape = 's32[2]{0}', space=sflag, size = 0x8, scoped, tag = 'scoped memory for tpu_custom_call.1']
    #allocation8 [shape = 'u8[6144]{0}', space=vmem, size = 0x1800, scoped, tag = 'output window, operand 0']
    %16 = vsyncpa [#allocation6], 0
    %s17 = scalar_lea.sflag [#allocation6], 1
    %18 = vsyncpa %s17, 0
    %19 = vsyncpa [#allocation7], 0
    %s20 = scalar_lea.sflag [#allocation7], 1
    %21 = vsyncpa %s20, 0
    loop: start=0, step=1, limit=4
    $region2: #{tpu_custom_call.1} parent=1 // loop_pre_header
      _
    $region3: #{tpu_custom_call.1} parent=1 // loop_header
      %s23 = sphi 0, %s27
      %p24 = scmp.ge.s32.totalorder %s23, 4
      %s30 = sphi 0, %s42
      %s31 = sphi 0, %s38
      %s32 = sphi 0, %s30
      %s33 = sphi 0, %s31
      %s34 = sphi 0, %s32
      %s35 = sphi 0, %s33
      %s47 = sphi 0, %s49
      %s50 = sphi 0, %s47
      %s51 = sphi 0, %s50
      %s67 = sphi 0, %s51
      %s75 = sphi 0, %s77
      %s78 = sphi 0, %s75
      %s79 = sphi 0, %s78
      %s95 = sphi 0, %s79
    $region4: #{tpu_custom_call.1} parent=1 // loop_header_branch
      %26 = sbr.rel (%p24) target = $region8
    $region5: #{tpu_custom_call.1} parent=1 // loop_body
      %s28 = ssub.s32 %s23, 1
      %s29 = ssub.s32 %s23, 2
      %s36 = sadd.s32 1, %s31
      %p37 = scmp.ge.s32.totalorder %s36, 1
      %s38 = scalar_select %p37, 0, %s36
      %s39 = sadd.s32 1, %s30
      %s40 = scalar_select %p37, %s39, %s30
      %p41 = scmp.ge.s32.totalorder %s40, 2
      %s42 = scalar_select %p41, 0, %s40
      %s43 = ssub.s32 %s30, %s42
      %s44 = ssub.s32 %s31, %s38
      %s45 = sor.u32 %s43, %s44
      %p46 = scmp.eq.s32.totalorder %s45, 0
      %s48 = sadd.s32 %s47, 1
      %s49 = scalar_select %p46, %s47, %s48
      %p52 = pneg %p46
      %p53 = scmp.eq.s32.totalorder %s23, 1
      %p54 = por %p52, %p53
      %p55 = scmp.ne.s32.totalorder %s47, %s50
      %p56 = scmp.eq.s32.totalorder %s23, 0
      %p57 = por %p55, %p56
      %p58 = scmp.ne.s32.totalorder %s47, %s50
      %p59 = scmp.eq.s32.totalorder %s28, 1
      %p60 = por %p58, %p59
      %p61 = scmp.ne.s32.totalorder %s50, %s51
      %p62 = scmp.eq.s32.totalorder %s28, 0
      %p63 = por %p61, %p62
      %p64 = scmp.ne.s32.totalorder %s50, %s51
      %p65 = scmp.eq.s32.totalorder %s29, 1
      %p66 = por %p64, %p65
      %p68 = scmp.ne.s32.totalorder %s51, %s67
      %p69 = scmp.eq.s32.totalorder %s29, 0
      %p70 = por %p68, %p69
      %s71 = ssub.s32 %s30, %s42
      %s72 = ssub.s32 %s31, %s38
      %s73 = sor.u32 %s71, %s72
      %p74 = scmp.eq.s32.totalorder %s73, 0
      %s76 = sadd.s32 %s75, 1
      %s77 = scalar_select %p74, %s75, %s76
      %p80 = pneg %p74
      %p81 = scmp.eq.s32.totalorder %s23, 1
      %p82 = por %p80, %p81
      %p83 = scmp.ne.s32.totalorder %s75, %s78
      %p84 = scmp.eq.s32.totalorder %s23, 0
      %p85 = por %p83, %p84
      %p86 = scmp.ne.s32.totalorder %s75, %s78
      %p87 = scmp.eq.s32.totalorder %s28, 1
      %p88 = por %p86, %p87
      %p89 = scmp.ne.s32.totalorder %s78, %s79
      %p90 = scmp.eq.s32.totalorder %s28, 0
      %p91 = por %p89, %p90
      %p92 = scmp.ne.s32.totalorder %s78, %s79
      %p93 = scmp.eq.s32.totalorder %s29, 1
      %p94 = por %p92, %p93
      %p96 = scmp.ne.s32.totalorder %s79, %s95
      %p97 = scmp.eq.s32.totalorder %s29, 0
      %p98 = por %p96, %p97
      %p99 = scmp.le.s32.totalorder 1, %s23
      %p100 = scmp.lt.s32.totalorder %s23, 3
      %p101 = pnand %p99, %p100
      %p102 = pneg %p101
      // Predicated region
      $region9: #{tpu_custom_call.1} parent=5 // pred_check
        _
      $region10: #{tpu_custom_call.1} parent=5 // pred_check_branch
        %104 = sbr.rel (%p101) target = $region12
      $region11: #{tpu_custom_call.1} parent=5 // pred_region
        %s105 = ssub.s32 %s23, 1
      $region12: #{tpu_custom_call.1} parent=5 // pred_fallthru
        _
      %p106 = scmp.lt.s32.totalorder %s23, 2
      // Predicated region
      $region13: #{tpu_custom_call.1} parent=5 // pred_check
        %p107 = pneg %p106
      $region14: #{tpu_custom_call.1} parent=5 // pred_check_branch
        %109 = sbr.rel (%p107) target = $region16
      $region15: #{tpu_custom_call.1} parent=5 // pred_region
        // Predicated region
        $region17: #{tpu_custom_call.1} parent=15 // pred_check
          %p110 = pneg %p57
        $region18: #{tpu_custom_call.1} parent=15 // pred_check_branch
          %112 = sbr.rel (%p110) target = $region20
        $region19: #{tpu_custom_call.1} parent=15 // pred_region
          %s113 = sand.u32 %s47, 1
          %s114 = scalar_lea.sflag [#allocation6], %s113
          %s115 = sand.u32 %s47, 1
          %s116 = smul.addr %s115, 6
          %s117 = scalar_lea.vmem [#allocation5], %s116
          %s119 = ssub.s32 96, 96
          %120 = vsyncadd %s114, %s119
          %s121 = smul.addr %s30, 3
          %s122 = sadd.s32 %s31, %s121
          %s123 = smul.addr %s122, 32
          %s124 = scalar_lea.hbm %s2, %s123
          %s125 = sshll.u32 %s117, 4
          %s126 = int_to_ptr.vmem [resolvable:$true] %s125
          %131 = dma.hbm_to_vmem [thread:$0]  %s124, 96, %s126, %s114, 32, 32, 2
        $region20: #{tpu_custom_call.1} parent=15 // pred_fallthru
          _
      $region16: #{tpu_custom_call.1} parent=5 // pred_fallthru
        _
      %p132 = scmp.le.s32.totalorder 1, %s23
      %p133 = scmp.lt.s32.totalorder %s23, 3
      %p134 = pnand %p132, %p133
      %p135 = pneg %p134
      // Predicated region
      $region21: #{tpu_custom_call.1} parent=5 // pred_check
        _
      $region22: #{tpu_custom_call.1} parent=5 // pred_check_branch
        %137 = sbr.rel (%p134) target = $region24
      $region23: #{tpu_custom_call.1} parent=5 // pred_region
        %s138 = ssub.s32 %s23, 1
        %s139 = sand.u32 %s50, 1
        %s140 = scalar_lea.sflag [#allocation6], %s139
        %s141 = sand.u32 %s50, 1
        %s142 = smul.addr %s141, 6
        %s143 = scalar_lea.vmem [#allocation5], %s142
        // Predicated region
        $region25: #{tpu_custom_call.1} parent=23 // pred_check
          %p144 = pneg %p63
        $region26: #{tpu_custom_call.1} parent=23 // pred_check_branch
          %146 = sbr.rel (%p144) target = $region28
        $region27: #{tpu_custom_call.1} parent=23 // pred_region
          %147 = dma.done %s140, 96
        $region28: #{tpu_custom_call.1} parent=23 // pred_fallthru
          _
        %s148 = sand.u32 %s50, 1
        %s149 = scalar_lea.sflag [#allocation6], %s148
        %s150 = sand.u32 %s50, 1
        %s151 = smul.addr %s150, 6
        %s152 = scalar_lea.vmem [#allocation5], %s151
        %p153 = pneg %p63
        %p154 = pneg %p60
        %p155 = pneg %p91
        %p156 = pneg %p88
        %s157 = sand.u32 %s78, 1
        %s158 = scalar_lea.sflag [#allocation7], %s157
        %s159 = sand.u32 %s78, 1
        %s160 = smul.addr %s159, 6
        %s161 = scalar_lea.vmem [#allocation8], %s160
        %v162 = vld [vmem:[%s143] sm:$0x3]
        %s163 = scalar_lea.vmem %s143, 2 [#allocation5]
        %v164 = vld [vmem:[%s163] sm:$0x3]
        %s165 = scalar_lea.vmem %s143, 4 [#allocation5]
        %v166 = vld [vmem:[%s165] sm:$0x3]
        %s167 = sld [smem:[#allocation3]]
        %v168 = vstv %s167
        %v169 = vmul.f32 %v162, %v168
        %s170 = sld [smem:[#allocation3 + $0x80]]
        %v171 = vstv %s170
        %v172 = vmul.f32 %v164, %v171
        %v173 = vadd.f32 %v169, %v172
        %s174 = sld [smem:[#allocation3 + $0x100]]
        %v175 = vstv %s174
        %v176 = vmul.f32 %v166, %v175
        %v177 = vadd.f32 %v173, %v176
        %s178 = sld [smem:[#allocation4]]
        %v179 = vstv %s178
        %v180 = vadd.f32 %v177, %v179
        %181 = vst [vmem:[%s161] sm:$0x3] %v180
        %s182 = sld [smem:[#allocation3 + $0x1]]
        %v183 = vstv %s182
        %v184 = vmul.f32 %v162, %v183
        %s185 = sld [smem:[#allocation3 + $0x81]]
        %v186 = vstv %s185
        %v187 = vmul.f32 %v164, %v186
        %v188 = vadd.f32 %v184, %v187
        %s189 = sld [smem:[#allocation3 + $0x101]]
        %v190 = vstv %s189
        %v191 = vmul.f32 %v166, %v190
        %v192 = vadd.f32 %v188, %v191
        %s193 = sld [smem:[#allocation4 + $0x1]]
        %v194 = vstv %s193
        %v195 = vadd.f32 %v192, %v194
        %s196 = scalar_lea.vmem %s161, 2 [#allocation8]
        %197 = vst [vmem:[%s196] sm:$0x3] %v195
        %s198 = sld [smem:[#allocation3 + $0x2]]
        %v199 = vstv %s198
        %v200 = vmul.f32 %v162, %v199
        %s201 = sld [smem:[#allocation3 + $0x82]]
        %v202 = vstv %s201
        %v203 = vmul.f32 %v164, %v202
        %v204 = vadd.f32 %v200, %v203
        %s205 = sld [smem:[#allocation3 + $0x102]]
        %v206 = vstv %s205
        %v207 = vmul.f32 %v166, %v206
        %v208 = vadd.f32 %v204, %v207
        %s209 = sld [smem:[#allocation4 + $0x2]]
        %v210 = vstv %s209
        %v211 = vadd.f32 %v208, %v210
        %s212 = scalar_lea.vmem %s161, 4 [#allocation8]
        %213 = vst [vmem:[%s212] sm:$0x3] %v211
        %s214 = sand.u32 %s78, 1
        %s215 = scalar_lea.sflag [#allocation7], %s214
        %s216 = sand.u32 %s78, 1
        %s217 = smul.addr %s216, 6
        %s218 = scalar_lea.vmem [#allocation8], %s217
        // Predicated region
        $region29: #{tpu_custom_call.1} parent=23 // pred_check
          %p219 = pneg %p88
        $region30: #{tpu_custom_call.1} parent=23 // pred_check_branch
          %221 = sbr.rel (%p219) target = $region32
        $region31: #{tpu_custom_call.1} parent=23 // pred_region
          %s223 = ssub.s32 96, 96
          %224 = vsyncadd %s215, %s223
          %s225 = smul.addr %s32, 3
          %s226 = sadd.s32 %s33, %s225
          %s227 = smul.addr %s226, 32
          %s228 = scalar_lea.hbm %s3, %s227
          %s229 = sshll.u32 %s218, 4
          %s230 = int_to_ptr.vmem [resolvable:$true] %s229
          %235 = dma.vmem_to_hbm [thread:$0]  %s230, 96, %s228, %s215, 32, 32, 2
        $region32: #{tpu_custom_call.1} parent=23 // pred_fallthru
          _
      $region24: #{tpu_custom_call.1} parent=5 // pred_fallthru
        _
      %p236 = scmp.le.s32.totalorder 2, %s23
      // Predicated region
      $region33: #{tpu_custom_call.1} parent=5 // pred_check
        %p237 = pneg %p236
      $region34: #{tpu_custom_call.1} parent=5 // pred_check_branch
        %239 = sbr.rel (%p237) target = $region36
      $region35: #{tpu_custom_call.1} parent=5 // pred_region
        %s240 = ssub.s32 %s23, 2
        // Predicated region
        $region37: #{tpu_custom_call.1} parent=35 // pred_check
          %p241 = pneg %p94
        $region38: #{tpu_custom_call.1} parent=35 // pred_check_branch
          %243 = sbr.rel (%p241) target = $region40
        $region39: #{tpu_custom_call.1} parent=35 // pred_region
          %s244 = sand.u32 %s79, 1
          %s245 = scalar_lea.sflag [#allocation7], %s244
          %s246 = sand.u32 %s79, 1
          %s247 = smul.addr %s246, 6
          %s248 = scalar_lea.vmem [#allocation8], %s247
          %249 = dma.done %s245, 96
        $region40: #{tpu_custom_call.1} parent=35 // pred_fallthru
          _
      $region36: #{tpu_custom_call.1} parent=5 // pred_fallthru
        _
    $region6: #{tpu_custom_call.1} parent=1 // loop_footer
      %s27 = sadd.s32 1, %s23
    $region7: #{tpu_custom_call.1} parent=1 // loop_footer_branch
      %22 = sbr.rel target = $region3
    $region8: #{tpu_custom_call.1} parent=1 // loop_exit
      _
    %250 = vsyncpa [#allocation6], 1
    %s251 = scalar_lea.sflag [#allocation6], 1
    %252 = vsyncpa %s251, 1
    %253 = vsyncpa [#allocation7], 1
    %s254 = scalar_lea.sflag [#allocation7], 1
    %255 = vsyncpa %s254, 1

</llo_original>
